<compile_context>
chip_gen: v7x
topology: tpu7x:2x2x1
jax: 0.10.0
libtpu: 0.0.40
codegen_flags: <defaults>
</compile_context>

<pallas_src>
import functools

import jax
import jax.numpy as jnp
from jax import lax
from jax.experimental import pallas as pl
from jax.experimental.pallas import tpu as pltpu


def _device_profile():
    """Per-generation block budget / VMEM limit / core count (conservative fallback)."""
    kind = ""
    try:
        kind = jax.devices()[0].device_kind.lower()
    except Exception:
        pass
    if "v7" in kind or "7x" in kind:
        # 3.2 TB/s HBM: bigger blocks to hide the ~0.35us per-step cost; 64 MiB
        # physical VMEM per TC, so raise the scoped limit explicitly.
        return dict(budget=6 << 20, floor=48 << 20, cap=48 << 20, cores=2)
    if "v6" in kind:
        return dict(budget=4 << 20, floor=32 << 20, cap=96 << 20, cores=1)
    if "v5p" in kind or "v4" in kind:
        # megacore parts: 2 TCs share work via the "parallel" axis
        return dict(budget=4 << 20, floor=32 << 20, cap=96 << 20, cores=2)
    # v5e / unknown: keep blocks modest, plenty of physical VMEM headroom.
    return dict(budget=2 << 20, floor=32 << 20, cap=64 << 20, cores=1)


def _cosine_loss_kernel(x_ref, y_ref, o_ref, acc_ref, *,
                        N, S, bN, tS, eps, mask_batch, mask_spatial):
    """One (bN, C, tS) tile of each input.

    x_ref, y_ref : (bN, C, tS) VMEM tiles (native dtype; promoted in-kernel)
    o_ref        : (1, 1, tS) lane-dense per-batch-block partial sums
    acc_ref      : (bN, tS) f32 vector accumulator (persists across spatial axis)
    """
    j = pl.program_id(1)

    @pl.when(j == 0)
    def _():
        acc_ref[...] = jnp.zeros_like(acc_ref)

    x = x_ref[...].astype(jnp.float32)  # (bN, C, tS)
    y = y_ref[...].astype(jnp.float32)  # (bN, C, tS)

    dot = jnp.sum(x * y, axis=1)        # (bN, tS)
    nx2 = jnp.sum(x * x, axis=1)        # (bN, tS)
    ny2 = jnp.sum(y * y, axis=1)        # (bN, tS)

    # 1 / (max(||x||, eps) * max(||y||, eps)) via EUP rsqrt (no sqrt/divide).
    eps2 = jnp.float32(eps) * jnp.float32(eps)
    inv = lax.rsqrt(jnp.maximum(nx2, eps2)) * lax.rsqrt(jnp.maximum(ny2, eps2))
    ano = 1.0 - dot * inv               # (bN, tS)

    if mask_spatial:
        # Ragged spatial tail: columns >= S (unspecified OOB data) contribute 0.
        col = j * tS + lax.broadcasted_iota(jnp.int32, ano.shape, 1)
        ano = jnp.where(col < S, ano, 0.0)
    if mask_batch:
        # Ragged batch tail: rows >= N (unspecified OOB data) contribute 0.
        i = pl.program_id(0)
        row = i * bN + lax.broadcasted_iota(jnp.int32, ano.shape, 0)
        ano = jnp.where(row < N, ano, 0.0)

    # Pure VPU elementwise accumulate; no per-step cross-lane reduce.
    acc_ref[...] += ano

    @pl.when(j == pl.num_programs(1) - 1)
    def _():
        # Single cross-sublane reduce per batch block -> lane-dense output row.
        o_ref[0] = jnp.sum(acc_ref[...], axis=0, keepdims=True)  # (1, tS)


def cosine_loss(feature1, feature2, *, eps=1e-8):
    """Pallas TPU implementation of CosineLoss.forward (NCHW inputs)."""
    assert feature1.shape == feature2.shape
    N, C, H, W = feature1.shape
    S = H * W
    itemsize = jnp.dtype(feature1.dtype).itemsize

    prof = _device_profile()
    budget = prof["budget"]
    LANE = 128

    # NCHW -> (N, C, S): a pure reshape, no copy, no padding.
    x = feature1.reshape(N, C, S)
    y = feature2.reshape(N, C, S)

    # --- spatial tile selection (no wrapper-side padding) -------------------
    per_col_bytes = C * itemsize
    max_ts = max(LANE, budget // per_col_bytes)   # shrink tS if C alone is huge
    if S <= max_ts:
        # Full spatial extent as the last block dim: legal (== full array dim),
        # fully contiguous DMA per batch block, no masking needed.
        tS = S
    else:
        cap = (max_ts // LANE) * LANE
        tS = 0
        d = cap
        while d >= LANE:                 # prefer a lane-multiple that divides S
            if S % d == 0:
                tS = d
                break
            d -= LANE
        if tS == 0:
            tS = cap                      # ragged tail -> masked in kernel
    n_s = pl.cdiv(S, tS)
    mask_spatial = (n_s * tS != S)

    # --- batch blocking ------------------------------------------------------
    block_col_bytes = C * tS * itemsize
    bN = max(1, budget // block_col_bytes)
    bN = min(bN, N)
    if prof["cores"] >= 2 and N >= 2:
        # Keep >= 2 batch blocks so the "parallel" axis feeds both TensorCores.
        bN = min(bN, max(1, N // 2))
    Nb = pl.cdiv(N, bN)
    mask_batch = (Nb * bN != N)

    grid = (Nb, n_s)

    kernel = functools.partial(
        _cosine_loss_kernel, N=N, S=S, bN=bN, tS=tS, eps=eps,
        mask_batch=mask_batch, mask_spatial=mask_spatial)

    # Scoped-VMEM limit derived from the actual pipeline footprint:
    # 2 inputs x 2 pipeline buffers x block  +  double-buffered output row
    # +  f32 accumulator scratch  +  headroom for compiler internals.
    block_bytes = bN * C * tS * itemsize
    vmem_need = 4 * block_bytes + 2 * tS * 4 + bN * tS * 4 + (4 << 20)
    vmem_limit = int(min(prof["cap"], max(vmem_need, prof["floor"])))
    # TODO(synk): for extreme C (C*tS*itemsize >> budget) add a third
    # "arbitrary" channel grid axis with three f32 accumulators instead of
    # relying on a raised vmem_limit.

    out = pl.pallas_call(
        kernel,
        out_shape=jax.ShapeDtypeStruct((Nb, 1, tS), jnp.float32),
        grid_spec=pltpu.PrefetchScalarGridSpec(
            num_scalar_prefetch=0,
            grid=grid,
            in_specs=[
                pl.BlockSpec((bN, C, tS), lambda i, j: (i, 0, j)),
                pl.BlockSpec((bN, C, tS), lambda i, j: (i, 0, j)),
            ],
            out_specs=pl.BlockSpec((1, 1, tS), lambda i, j: (i, 0, 0)),
            scratch_shapes=[pltpu.VMEM((bN, tS), jnp.float32)],
        ),
        compiler_params=pltpu.CompilerParams(
            dimension_semantics=("parallel", "arbitrary"),
            vmem_limit_bytes=vmem_limit),
    )(x, y)

    # Finish the (tiny) reduction in the wrapper; masked lanes/rows are exactly 0.
    return jnp.sum(out) / jnp.float32(N * S)


def _reference_cosine_loss(f1, f2, eps=1e-8):
    """Pure-JAX reference of the PyTorch forward."""
    f1 = f1.astype(jnp.float32)
    f2 = f2.astype(jnp.float32)
    dot = jnp.sum(f1 * f2, axis=1)
    n1 = jnp.sqrt(jnp.sum(f1 * f1, axis=1))
    n2 = jnp.sqrt(jnp.sum(f2 * f2, axis=1))
    cos = dot / (jnp.maximum(n1, eps) * jnp.maximum(n2, eps))
    ano = 1.0 - cos
    return jnp.mean(jnp.mean(ano.reshape(ano.shape[0], -1), axis=-1))


if __name__ == "__main__":
    key = jax.random.PRNGKey(0)
    k1, k2, k3, k4 = jax.random.split(key, 4)

    # Primary check: NCHW inputs (batch=2, channels=4, spatial=16x16)
    f1 = jax.random.normal(k1, (2, 4, 16, 16), dtype=jnp.float32)
    f2 = jax.random.normal(k2, (2, 4, 16, 16), dtype=jnp.float32)
    loss = cosine_loss(f1, f2)
    jax.block_until_ready(loss)
    ref = _reference_cosine_loss(f1, f2)
    assert jnp.allclose(loss, ref, rtol=1e-5, atol=1e-5), (loss, ref)

    # Secondary check: odd batch + non-128-multiple spatial extent (14x14),
    # exercising the pad-free full-S block path.
    g1 = jax.random.normal(k3, (3, 4, 14, 14), dtype=jnp.float32)
    g2 = jax.random.normal(k4, (3, 4, 14, 14), dtype=jnp.float32)
    loss2 = cosine_loss(g1, g2)
    jax.block_until_ready(loss2)
    ref2 = _reference_cosine_loss(g1, g2)
    assert jnp.allclose(loss2, ref2, rtol=1e-5, atol=1e-5), (loss2, ref2)

    print("KERNEL_OK")
</pallas_src>

<mosaic_0001>
module attributes {stable_mosaic.version = 11 : i64} {
  func.func @_cosine_loss_kernel(%arg0: i32, %arg1: i32, %arg2: memref<2x4x256xf32, #tpu.memory_space<vmem>>, %arg3: memref<2x4x256xf32, #tpu.memory_space<vmem>>, %arg4: memref<1x1x256xf32, #tpu.memory_space<vmem>>, %arg5: memref<2x256xf32, #tpu.memory_space<vmem>>) attributes {dimension_semantics = [#tpu.dimension_semantics<parallel>, #tpu.dimension_semantics<arbitrary>], iteration_bounds = array<i64: 1, 1>, scalar_prefetch = 0 : i64, scratch_operands = 1 : i64, tpu.core_type = #tpu.core_type<tc>, window_params = [{transform_indices = @transform_0, window_bounds = array<i64: 2, 4, 256>}, {transform_indices = @transform_1, window_bounds = array<i64: 2, 4, 256>}, {transform_indices = @transform_2, window_bounds = array<i64: 1, 1, 256>}]} {
    %c0_i32 = arith.constant 0 : i32
    %0 = arith.cmpi eq, %arg1, %c0_i32 : i32
    %1 = arith.extui %0 : i1 to i32
    %c0_i32_0 = arith.constant 0 : i32
    %2 = arith.cmpi ne, %1, %c0_i32_0 : i32
    scf.if %2 {
      %cst_17 = arith.constant 0.000000e+00 : f32
      %28 = vector.broadcast %cst_17 : f32 to vector<2x256xf32>
      %c0_18 = arith.constant 0 : index
      %c0_19 = arith.constant 0 : index
      %29 = vector.load %arg5[%c0_18, %c0_19] : memref<2x256xf32, #tpu.memory_space<vmem>>, vector<2x256xf32>
      tpu.vector_store %arg5[%c0_18, %c0_19], %28 {strides = array<i32>} : memref<2x256xf32, #tpu.memory_space<vmem>>, vector<2x256xf32>,
    } else {
    }
    %c0 = arith.constant 0 : index
    %c0_1 = arith.constant 0 : index
    %c0_2 = arith.constant 0 : index
    %3 = vector.load %arg2[%c0, %c0_1, %c0_2] : memref<2x4x256xf32, #tpu.memory_space<vmem>>, vector<2x4x256xf32>
    %c0_3 = arith.constant 0 : index
    %c0_4 = arith.constant 0 : index
    %c0_5 = arith.constant 0 : index
    %4 = vector.load %arg3[%c0_3, %c0_4, %c0_5] : memref<2x4x256xf32, #tpu.memory_space<vmem>>, vector<2x4x256xf32>
    %5 = arith.mulf %3, %4 : vector<2x4x256xf32>
    %cst = arith.constant dense<0.000000e+00> : vector<2x256xf32>
    %6 = vector.multi_reduction <add>, %5, %cst [1] : vector<2x4x256xf32> to vector<2x256xf32>
    %7 = arith.mulf %3, %3 : vector<2x4x256xf32>
    %cst_6 = arith.constant dense<0.000000e+00> : vector<2x256xf32>
    %8 = vector.multi_reduction <add>, %7, %cst_6 [1] : vector<2x4x256xf32> to vector<2x256xf32>
    %9 = arith.mulf %4, %4 : vector<2x4x256xf32>
    %cst_7 = arith.constant dense<0.000000e+00> : vector<2x256xf32>
    %10 = vector.multi_reduction <add>, %9, %cst_7 [1] : vector<2x4x256xf32> to vector<2x256xf32>
    %cst_8 = arith.constant 9.99999993E-9 : f32
    %cst_9 = arith.constant 9.99999993E-9 : f32
    %11 = arith.mulf %cst_8, %cst_9 : f32
    %12 = vector.broadcast %11 : f32 to vector<2x256xf32>
    %13 = arith.maximumf %8, %12 : vector<2x256xf32>
    %14 = math.rsqrt %13 : vector<2x256xf32>
    %15 = vector.broadcast %11 : f32 to vector<2x256xf32>
    %16 = arith.maximumf %10, %15 : vector<2x256xf32>
    %17 = math.rsqrt %16 : vector<2x256xf32>
    %18 = arith.mulf %14, %17 : vector<2x256xf32>
    %19 = arith.mulf %6, %18 : vector<2x256xf32>
    %cst_10 = arith.constant 1.000000e+00 : f32
    %20 = vector.broadcast %cst_10 : f32 to vector<2x256xf32>
    %21 = arith.subf %20, %19 : vector<2x256xf32>
    %c0_11 = arith.constant 0 : index
    %c0_12 = arith.constant 0 : index
    %22 = vector.load %arg5[%c0_11, %c0_12] : memref<2x256xf32, #tpu.memory_space<vmem>>, vector<2x256xf32>
    %23 = arith.addf %22, %21 : vector<2x256xf32>
    %c0_13 = arith.constant 0 : index
    %c0_14 = arith.constant 0 : index
    %24 = vector.load %arg5[%c0_13, %c0_14] : memref<2x256xf32, #tpu.memory_space<vmem>>, vector<2x256xf32>
    tpu.vector_store %arg5[%c0_13, %c0_14], %23 {strides = array<i32>} : memref<2x256xf32, #tpu.memory_space<vmem>>, vector<2x256xf32>,
    %c0_i32_15 = arith.constant 0 : i32
    %25 = arith.cmpi eq, %arg1, %c0_i32_15 : i32
    %26 = arith.extui %25 : i1 to i32
    %c0_i32_16 = arith.constant 0 : i32
    %27 = arith.cmpi ne, %26, %c0_i32_16 : i32
    scf.if %27 {
      %c0_17 = arith.constant 0 : index
      %c0_18 = arith.constant 0 : index
      %28 = vector.load %arg5[%c0_17, %c0_18] : memref<2x256xf32, #tpu.memory_space<vmem>>, vector<2x256xf32>
      %cst_19 = arith.constant dense<0.000000e+00> : vector<256xf32>
      %29 = vector.multi_reduction <add>, %28, %cst_19 [0] : vector<2x256xf32> to vector<256xf32>
      %30 = vector.shape_cast %29 : vector<256xf32> to vector<1x256xf32>
      %c0_20 = arith.constant 0 : index
      %c0_21 = arith.constant 0 : index
      %c0_22 = arith.constant 0 : index
      %31 = vector.load %arg4[%c0_20, %c0_21, %c0_22] : memref<1x1x256xf32, #tpu.memory_space<vmem>>, vector<1x1x256xf32>
      %32 = vector.shape_cast %31 : vector<1x1x256xf32> to vector<1x256xf32>
      %33 = vector.shape_cast %30 : vector<1x256xf32> to vector<1x1x256xf32>
      tpu.vector_store %arg4[%c0_20, %c0_21, %c0_22], %33 {strides = array<i32>} : memref<1x1x256xf32, #tpu.memory_space<vmem>>, vector<1x1x256xf32>,
    } else {
    }
    return
  }
  func.func @transform_0(%arg0: i32, %arg1: i32) -> (i32, i32, i32) {
    %c0_i32 = arith.constant 0 : i32
    %c0_i32_0 = arith.constant 0 : i32
    return %arg0, %c0_i32, %arg1 : i32, i32, i32
  }
  func.func @transform_1(%arg0: i32, %arg1: i32) -> (i32, i32, i32) {
    %c0_i32 = arith.constant 0 : i32
    %c0_i32_0 = arith.constant 0 : i32
    return %arg0, %c0_i32, %arg1 : i32, i32, i32
  }
  func.func @transform_2(%arg0: i32, %arg1: i32) -> (i32, i32, i32) {
    %c0_i32 = arith.constant 0 : i32
    %c0_i32_0 = arith.constant 0 : i32
    %c0_i32_1 = arith.constant 0 : i32
    return %arg0, %c0_i32, %c0_i32_0 : i32, i32, i32
  }
}

</mosaic_0001>

<llo_original>
// kernel: tpu_custom_call.1
$region0: #{tpu_custom_call.1}
  #allocation0 [shape = 'u32[]', space=smem, size = 0x4, offset = 0x4, fixed_abs, tag = 'smem constant byte address 0x4 - core index']
  #allocation1 [shape = 'u32[144,128]{1,0:T(1,128)}', space=vmem, size = 0x12000, scoped, tag = 'internal scratch']
  #allocation2 [shape = 'f32[2,256]{1,0:T(2,128)}', space=vmem, size = 0x800, scoped, tag = 'scratch operand']
  %s0 = inlined_call_operand.hbm [shape: f32[2,4,256], index: 0, kind: input, shape index: {}]
  %s1 = inlined_call_operand.hbm [shape: f32[2,4,256], index: 1, kind: input, shape index: {}]
  %s2 = inlined_call_operand.hbm [shape: f32[1,1,256], index: 2, kind: output, shape index: {}]
  %s3 = sld [smem:[#allocation0]]
  $region34: #{tpu_custom_call.1} parent=0
    _
  %s5 = ssub.s32 1, %s3
  %s6 = scalar_select 0, %s5, %s3
  $region1: #{tpu_custom_call.1} parent=0
    #allocation3 [shape = 'u8[8192]{0}', space=vmem, size = 0x2000, scoped, tag = 'input window, operand 0, single buffered']
    #allocation4 [shape = 's32[1]{0}', space=sflag, size = 0x4, scoped, tag = 'scoped memory for tpu_custom_call.1']
    #allocation5 [shape = 's32[1]{0}', space=sflag, size = 0x4, scoped, tag = 'scoped memory for tpu_custom_call.1']
    #allocation6 [shape = 'u8[8192]{0}', space=vmem, size = 0x2000, scoped, tag = 'input window, operand 1, single buffered']
    #allocation7 [shape = 's32[1]{0}', space=sflag, size = 0x4, scoped, tag = 'scoped memory for tpu_custom_call.1']
    #allocation8 [shape = 'u8[1024]{0}', space=vmem, size = 0x400, scoped, tag = 'output window, operand 0, single buffered']
    %7 = vsyncpa [#allocation4], 0
    %8 = vsyncpa [#allocation7], 0
    %9 = vsyncpa [#allocation5], 0
    // Predicated region
    $region2: #{tpu_custom_call.1} parent=1 // pred_check
      _
    $region3: #{tpu_custom_call.1} parent=1 // pred_check_branch
      %11 = sbr.rel (0) target = $region5
    $region4: #{tpu_custom_call.1} parent=1 // pred_region
      %s13 = ssub.s32 256, 256
      %14 = vsyncadd [#allocation4], %s13
      %s15 = sshll.u32 [#allocation3], 4
      %s16 = int_to_ptr.vmem [resolvable:$true] %s15
      %21 = dma.hbm_to_vmem [thread:$0]  %s0, 256, %s16, [#allocation4], 128, 128, 8
    $region5: #{tpu_custom_call.1} parent=1 // pred_fallthru
      _
    // Predicated region
    $region6: #{tpu_custom_call.1} parent=1 // pred_check
      _
    $region7: #{tpu_custom_call.1} parent=1 // pred_check_branch
      %23 = sbr.rel (0) target = $region9
    $region8: #{tpu_custom_call.1} parent=1 // pred_region
      %s25 = ssub.s32 256, 256
      %26 = vsyncadd [#allocation7], %s25
      %s27 = sshll.u32 [#allocation6], 4
      %s28 = int_to_ptr.vmem [resolvable:$true] %s27
      %33 = dma.hbm_to_vmem [thread:$0]  %s1, 256, %s28, [#allocation7], 128, 128, 8
    $region9: #{tpu_custom_call.1} parent=1 // pred_fallthru
      _
    // Predicated region
    $region10: #{tpu_custom_call.1} parent=1 // pred_check
      _
    $region11: #{tpu_custom_call.1} parent=1 // pred_check_branch
      %35 = sbr.rel (0) target = $region13
    $region12: #{tpu_custom_call.1} parent=1 // pred_region
      %36 = dma.done [#allocation4], 256
    $region13: #{tpu_custom_call.1} parent=1 // pred_fallthru
      _
    // Predicated region
    $region14: #{tpu_custom_call.1} parent=1 // pred_check
      _
    $region15: #{tpu_custom_call.1} parent=1 // pred_check_branch
      %38 = sbr.rel (0) target = $region17
    $region16: #{tpu_custom_call.1} parent=1 // pred_region
      %39 = dma.done [#allocation7], 256
    $region17: #{tpu_custom_call.1} parent=1 // pred_fallthru
      _
    %p40 = scmp.eq.s32.totalorder 0, 0
    // Predicated region
    $region18: #{tpu_custom_call.1} parent=1 // pred_check
      %p41 = pneg %p40
    $region19: #{tpu_custom_call.1} parent=1 // pred_check_branch
      %43 = sbr.rel (%p41) target = $region21
    $region20: #{tpu_custom_call.1} parent=1 // pred_region
      %44 = vst [vmem:[#allocation2] sm:$0xf] 0.0
    $region21: #{tpu_custom_call.1} parent=1 // pred_fallthru
      _
    %v45 = vld [vmem:[#allocation3] sm:$0xff]
    %v46 = vld [vmem:[#allocation3 + $0x8] sm:$0xff]
    %v47 = vld [vmem:[#allocation6] sm:$0xff]
    %v48 = vld [vmem:[#allocation6 + $0x8] sm:$0xff]
    %v49 = vmul.f32 %v45, %v47
    %v50 = vmul.f32 %v46, %v48
    %v53 = vcombine.high %v49, %v49
    %v54 = vcombine.high %v50, %v50
    %vm57 = vcmask 1043456
    %v58 = vsel %vm57, %v49, 0.0
    %v59 = vrot.slane %v58, 4
    %v60 = vadd.f32 %v58, %v59
    %v61 = vrot.slane %v60, 2
    %v62 = vadd.f32 %v60, %v61
    %v63 = vrot.slane %v62, 1
    %v64 = vadd.f32 %v62, %v63
    %v65 = vsel %vm57, %v53, 0.0
    %v66 = vrot.slane %v65, 4
    %v67 = vadd.f32 %v65, %v66
    %v68 = vrot.slane %v67, 2
    %v69 = vadd.f32 %v67, %v68
    %v70 = vrot.slane %v69, 1
    %v71 = vadd.f32 %v69, %v70
    %v72 = vsel %vm57, %v50, 0.0
    %v73 = vrot.slane %v72, 4
    %v74 = vadd.f32 %v72, %v73
    %v75 = vrot.slane %v74, 2
    %v76 = vadd.f32 %v74, %v75
    %v77 = vrot.slane %v76, 1
    %v78 = vadd.f32 %v76, %v77
    %v79 = vsel %vm57, %v54, 0.0
    %v80 = vrot.slane %v79, 4
    %v81 = vadd.f32 %v79, %v80
    %v82 = vrot.slane %v81, 2
    %v83 = vadd.f32 %v81, %v82
    %v84 = vrot.slane %v83, 1
    %v85 = vadd.f32 %v83, %v84
    %v86 = vmul.f32 %v45, %v45
    %v87 = vmul.f32 %v46, %v46
    %v90 = vcombine.high %v86, %v86
    %v91 = vcombine.high %v87, %v87
    %v94 = vsel %vm57, %v86, 0.0
    %v95 = vrot.slane %v94, 4
    %v96 = vadd.f32 %v94, %v95
    %v97 = vrot.slane %v96, 2
    %v98 = vadd.f32 %v96, %v97
    %v99 = vrot.slane %v98, 1
    %v100 = vadd.f32 %v98, %v99
    %v101 = vsel %vm57, %v90, 0.0
    %v102 = vrot.slane %v101, 4
    %v103 = vadd.f32 %v101, %v102
    %v104 = vrot.slane %v103, 2
    %v105 = vadd.f32 %v103, %v104
    %v106 = vrot.slane %v105, 1
    %v107 = vadd.f32 %v105, %v106
    %v108 = vsel %vm57, %v87, 0.0
    %v109 = vrot.slane %v108, 4
    %v110 = vadd.f32 %v108, %v109
    %v111 = vrot.slane %v110, 2
    %v112 = vadd.f32 %v110, %v111
    %v113 = vrot.slane %v112, 1
    %v114 = vadd.f32 %v112, %v113
    %v115 = vsel %vm57, %v91, 0.0
    %v116 = vrot.slane %v115, 4
    %v117 = vadd.f32 %v115, %v116
    %v118 = vrot.slane %v117, 2
    %v119 = vadd.f32 %v117, %v118
    %v120 = vrot.slane %v119, 1
    %v121 = vadd.f32 %v119, %v120
    %v122 = vmul.f32 %v47, %v47
    %v123 = vmul.f32 %v48, %v48
    %v126 = vcombine.high %v122, %v122
    %v127 = vcombine.high %v123, %v123
    %v130 = vsel %vm57, %v122, 0.0
    %v131 = vrot.slane %v130, 4
    %v132 = vadd.f32 %v130, %v131
    %v133 = vrot.slane %v132, 2
    %v134 = vadd.f32 %v132, %v133
    %v135 = vrot.slane %v134, 1
    %v136 = vadd.f32 %v134, %v135
    %v137 = vsel %vm57, %v126, 0.0
    %v138 = vrot.slane %v137, 4
    %v139 = vadd.f32 %v137, %v138
    %v140 = vrot.slane %v139, 2
    %v141 = vadd.f32 %v139, %v140
    %v142 = vrot.slane %v141, 1
    %v143 = vadd.f32 %v141, %v142
    %v144 = vsel %vm57, %v123, 0.0
    %v145 = vrot.slane %v144, 4
    %v146 = vadd.f32 %v144, %v145
    %v147 = vrot.slane %v146, 2
    %v148 = vadd.f32 %v146, %v147
    %v149 = vrot.slane %v148, 1
    %v150 = vadd.f32 %v148, %v149
    %v151 = vsel %vm57, %v127, 0.0
    %v152 = vrot.slane %v151, 4
    %v153 = vadd.f32 %v151, %v152
    %v154 = vrot.slane %v153, 2
    %v155 = vadd.f32 %v153, %v154
    %v156 = vrot.slane %v155, 1
    %v157 = vadd.f32 %v155, %v156
    %v158 = vmax.f32 %v100, 1e-16
    %v159 = vmax.f32 %v107, 1e-16
    %v160 = vmax.f32 %v114, 1e-16
    %v161 = vmax.f32 %v121, 1e-16
    %v162 = vrsqrt.pop %v158
    %v163 = vrsqrt.pop %v159
    %v164 = vrsqrt.pop %v160
    %v165 = vrsqrt.pop %v161
    %v166 = vmax.f32 %v136, 1e-16
    %v167 = vmax.f32 %v143, 1e-16
    %v168 = vmax.f32 %v150, 1e-16
    %v169 = vmax.f32 %v157, 1e-16
    %v170 = vrsqrt.pop %v166
    %v171 = vrsqrt.pop %v167
    %v172 = vrsqrt.pop %v168
    %v173 = vrsqrt.pop %v169
    %v174 = vmul.f32 %v162, %v170
    %v175 = vmul.f32 %v163, %v171
    %v176 = vmul.f32 %v164, %v172
    %v177 = vmul.f32 %v165, %v173
    %v178 = vmul.f32 %v64, %v174
    %v179 = vmul.f32 %v71, %v175
    %v180 = vmul.f32 %v78, %v176
    %v181 = vmul.f32 %v85, %v177
    %v182 = vsub.f32 1.0, %v178
    %v183 = vsub.f32 1.0, %v179
    %v184 = vsub.f32 1.0, %v180
    %v185 = vsub.f32 1.0, %v181
    %v186 = vld [vmem:[#allocation2] sm:$0xf]
    %v191 = vcombine.low %v182, %v183
    %v193 = vunpack.c.l.s4 1983009808
    %v194 = vunpack.c.0.s8 %v193
    %v195 = vlaneseq
    %v196 = vshrl.u32 %v195, 7
    %v197 = vsub.s32 %v194, %v196
    %v198 = vrot.slane %v191, %v197
    %v199 = vcombine.low %v184, %v185
    %v201 = vunpack.c.l.s4 1983009808
    %v202 = vunpack.c.0.s8 %v201
    %v203 = vlaneseq
    %v204 = vshrl.u32 %v203, 7
    %v205 = vsub.s32 %v202, %v204
    %v206 = vrot.slane %v199, %v205
    %vm207 = vcmask 1044484
    %v208 = vsel %vm207, %v198, %v198
    %vm209 = vcmask 1046534
    %v210 = vsel %vm209, %v198, %v208
    %v211 = vrot.slane %v206, 7
    %vm212 = vcmask 1041409
    %v213 = vsel %vm212, %v211, %v210
    %vm214 = vcmask 1043459
    %v215 = vsel %vm214, %v211, %v213
    %vm216 = vcmask 1045509
    %v217 = vsel %vm216, %v211, %v215
    %vm218 = vcmask 1047559
    %v219 = vsel %vm218, %v211, %v217
    %v221 = vadd.f32 %v186, %v219
    %222 = vst [vmem:[#allocation2] sm:$0xf] %v221
    // Predicated region
    $region22: #{tpu_custom_call.1} parent=1 // pred_check
      %p223 = pneg %p40
    $region23: #{tpu_custom_call.1} parent=1 // pred_check_branch
      %225 = sbr.rel (%p223) target = $region25
    $region24: #{tpu_custom_call.1} parent=1 // pred_region
      %v226 = vld [vmem:[#allocation2] sm:$0xf]
      %v229 = vunpack.c.l.s4 1983009808
      %v230 = vunpack.c.0.s8 %v229
      %v231 = vlaneseq
      %v232 = vshrl.u32 %v231, 7
      %v233 = vsub.s32 %v230, %v232
      %v234 = vrot.slane %v226, %v233
      %v235 = vcombine.high %v234, %v234
      %vm238 = vcmask 1041408
      %v239 = vsel %vm238, %v234, 0.0
      %v240 = vrot.slane %v239, 4
      %v241 = vadd.f32 %v239, %v240
      %v242 = vrot.slane %v241, 2
      %v243 = vadd.f32 %v241, %v242
      %v244 = vrot.slane %v243, 1
      %v245 = vadd.f32 %v243, %v244
      %v246 = vsel %vm238, %v235, 0.0
      %v247 = vrot.slane %v246, 4
      %v248 = vadd.f32 %v246, %v247
      %v249 = vrot.slane %v248, 2
      %v250 = vadd.f32 %v248, %v249
      %v251 = vrot.slane %v250, 1
      %v252 = vadd.f32 %v250, %v251
      %v255 = vcombine.low %v245, %v252
      %v257 = vunpack.c.l.s4 1966171168
      %v258 = vunpack.c.0.s8 %v257
      %v259 = vlaneseq
      %v260 = vshrl.u32 %v259, 7
      %v261 = vsub.s32 %v258, %v260
      %v262 = vrot.slane %v255, %v261
      %v264 = vunpack.c.l.s4 1966171168
      %v265 = vunpack.c.0.s8 %v264
      %v266 = vlaneseq
      %v267 = vshrl.u32 %v266, 7
      %v268 = vsub.s32 %v265, %v267
      %v269 = vrot.slane %v262, %v268
      %v271 = vlaneseq
      %vm272 = vcmp.ge.s32.totalorder %v271, 0
      %vm273 = vcmp.lt.s32.totalorder %v271, 256
      %vm274 = vmand %vm272, %vm273
      %275 = vst.msk [vmem:[#allocation8] sm:$0x3] %vm274, %v269
    $region25: #{tpu_custom_call.1} parent=1 // pred_fallthru
      _
    // Predicated region
    $region26: #{tpu_custom_call.1} parent=1 // pred_check
      _
    $region27: #{tpu_custom_call.1} parent=1 // pred_check_branch
      %277 = sbr.rel (0) target = $region29
    $region28: #{tpu_custom_call.1} parent=1 // pred_region
      %s279 = ssub.s32 32, 32
      %280 = vsyncadd [#allocation5], %s279
      %s282 = sshll.u32 [#allocation8], 4
      %s283 = int_to_ptr.vmem [resolvable:$true] %s282
      %285 = dma.vmem_to_hbm [thread:$0]  %s283, 32, %s2, [#allocation5]
    $region29: #{tpu_custom_call.1} parent=1 // pred_fallthru
      _
    // Predicated region
    $region30: #{tpu_custom_call.1} parent=1 // pred_check
      _
    $region31: #{tpu_custom_call.1} parent=1 // pred_check_branch
      %287 = sbr.rel (0) target = $region33
    $region32: #{tpu_custom_call.1} parent=1 // pred_region
      %288 = dma.done [#allocation5], 32
    $region33: #{tpu_custom_call.1} parent=1 // pred_fallthru
      _
    %289 = vsyncpa [#allocation4], 1
    %290 = vsyncpa [#allocation7], 1
    %291 = vsyncpa [#allocation5], 1

</llo_original>
